<compile_context>
chip_gen: v7x
topology: tpu7x:2x2x1
jax: 0.10.0
libtpu: 0.0.40
codegen_flags: <defaults>
</compile_context>

<pallas_src>
import functools

import jax
import jax.numpy as jnp
from jax import lax
from jax.experimental import pallas as pl
from jax.experimental.pallas import tpu as pltpu

_LANE = 128


def _focal_loss_kernel(x_ref, tgt_ref, kw_ref, out_ref, *, gamma, num_classes,
                       n_pix, tsub, inner, need_mask):
    """One (batch, outer, inner-tile) grid step.

    x_ref   : (C, tsub, 128)  probabilities (pixels lane-dense, NCHW order kept)
    tgt_ref : (tsub, 128)     int32 class id per pixel
    kw_ref  : (C,)            per-class weights, SMEM scalars
    out_ref : (8, 128)        per-(batch, outer) partial-sum accumulator
    """
    o = pl.program_id(1)
    j = pl.program_id(2)

    @pl.when(j == 0)
    def _init():
        out_ref[...] = jnp.zeros_like(out_ref)

    tgt = tgt_ref[...]                                     # (tsub, 128) int32
    pt = jnp.zeros(tgt.shape, jnp.float32)
    alpha = jnp.zeros(tgt.shape, jnp.float32)

    # Per-class select replaces a (C, N) one-hot + cross-sublane reduce:
    # pure VPU compare/select, no XLU traffic, no C*N f32 temporary.
    if num_classes <= 16:
        for c in range(num_classes):                       # full unroll: optimal for small C
            sel = tgt == c
            pt = jnp.where(sel, x_ref[c].astype(jnp.float32), pt)
            alpha = jnp.where(sel, kw_ref[c], alpha)
    else:
        def body(c, carry):                                # bounded code size / vreg pressure
            pt_c, alpha_c = carry
            sel = tgt == c
            pt_c = jnp.where(sel, x_ref[c].astype(jnp.float32), pt_c)
            alpha_c = jnp.where(sel, kw_ref[c], alpha_c)
            return pt_c, alpha_c
        pt, alpha = lax.fori_loop(0, num_classes, body, (pt, alpha), unroll=8)

    if need_mask:
        # Last tile is partial (and/or lane padding exists): pixels past n_pix
        # are garbage / zero-padded. Forcing pt -> 1 makes their contribution
        # exactly 0 (log(1) == 0 and (1-1)**gamma == 0), no extra select needed.
        tile = o * inner + j
        row_ids = lax.broadcasted_iota(jnp.int32, (tsub, _LANE), 0)
        lane_ids = lax.broadcasted_iota(jnp.int32, (tsub, _LANE), 1)
        pix = (tile * tsub + row_ids) * _LANE + lane_ids
        pt = jnp.where(pix < n_pix, pt, 1.0)

    log_pt = jnp.log(pt) * alpha
    one_m_pt = 1.0 - pt
    if float(gamma) == int(gamma):         # integer gamma -> multiplies only (gamma=2 -> 1 vmul)
        focal = lax.integer_pow(one_m_pt, int(gamma))
    else:                                  # float gamma: guarded log/exp, returns 0 at pt == 1
        focal = jnp.where(
            one_m_pt > 0.0,
            jnp.exp(jnp.float32(gamma) * jnp.log(jnp.maximum(one_m_pt, 1e-38))),
            0.0,
        )
    loss = -(focal * log_pt)               # (tsub, 128); masked pixels are exactly 0

    # Fold to a fixed (8, 128) accumulator: sublane-aligned static slices -> pure vadds,
    # keeps the resident output block (and its HBM writeback) independent of tile size.
    acc8 = loss[0:8, :]
    for k in range(1, tsub // 8):
        acc8 = acc8 + loss[k * 8:(k + 1) * 8, :]
    out_ref[...] += acc8


def _vmem_budget_bytes():
    """Per-generation VMEM budget with headroom below physical capacity."""
    try:
        phys = int(pltpu.get_tpu_info().vmem_capacity_bytes)
    except Exception:
        phys = 64 << 20          # conservative fallback: v7x physical VMEM (v5e/v6e: 128 MiB)
    return min((phys * 3) // 4, 96 << 20)


def focal_loss(inp, target, k_weight, gamma=2, *, max_block_rows=512):
    """inp: (B, C, H, W) probabilities; target: (B, H, W) int; k_weight: (C,)."""
    B, C, H, W = inp.shape
    n_pix = H * W
    rows = -(-n_pix // _LANE)                    # pixel rows of 128 lanes

    # Free, contiguous reshapes; only the sub-128 lane remainder is ever padded
    # (no full-tensor HBM round trip when n_pix is already a multiple of 128).
    x = inp.reshape(B, C, n_pix)
    tgt = target.reshape(B, n_pix).astype(jnp.int32)
    lane_pad = rows * _LANE - n_pix
    if lane_pad:
        x = jnp.pad(x, ((0, 0), (0, 0), (0, lane_pad)))
        tgt = jnp.pad(tgt, ((0, 0), (0, lane_pad)), constant_values=-1)
    x = x.reshape(B, C, rows, _LANE)
    tgt = tgt.reshape(B, rows, _LANE)
    kw = k_weight.astype(jnp.float32).reshape(C)

    # Tile size from the VMEM budget: double-buffered x block + tgt block per step.
    budget = _vmem_budget_bytes()
    per_row = 2 * (C + 1) * _LANE * 4            # bytes per sublane row (x + tgt, 2 buffers)
    tsub = min(max_block_rows, budget // per_row)
    tsub = max(8, (tsub // 8) * 8)               # multiple of 8 sublanes, >= 1 vreg
    tsub = min(tsub, max(8, -(-rows // 8) * 8))  # don't exceed the data

    total_tiles = -(-rows // tsub)
    # Megacore: with B == 1, split the tile axis so v7x's 2 TensorCores both get work.
    n_outer = 2 if (B == 1 and total_tiles >= 2 and total_tiles % 2 == 0) else 1
    inner = total_tiles // n_outer
    need_mask = (rows % tsub != 0) or (lane_pad != 0)

    kernel = functools.partial(
        _focal_loss_kernel, gamma=gamma, num_classes=C, n_pix=n_pix,
        tsub=tsub, inner=inner, need_mask=need_mask)

    vmem_limit = int(max(budget, per_row * tsub + (4 << 20)))

    partial_sums = pl.pallas_call(
        kernel,
        out_shape=jax.ShapeDtypeStruct((B, n_outer, 8, _LANE), jnp.float32),
        grid_spec=pltpu.PrefetchScalarGridSpec(
            num_scalar_prefetch=0,
            grid=(B, n_outer, inner),
            in_specs=[
                pl.BlockSpec((None, C, tsub, _LANE),
                             lambda b, o, j: (b, 0, o * inner + j, 0)),
                pl.BlockSpec((None, tsub, _LANE),
                             lambda b, o, j: (b, o * inner + j, 0)),
                pl.BlockSpec(memory_space=pltpu.MemorySpace.SMEM),
            ],
            out_specs=pl.BlockSpec((None, None, 8, _LANE),
                                   lambda b, o, j: (b, o, 0, 0)),
        ),
        compiler_params=pltpu.CompilerParams(
            dimension_semantics=("parallel", "parallel", "arbitrary"),
            vmem_limit_bytes=vmem_limit,
        ),
    )(x, tgt, kw)

    # Tiny (B, n_outer, 8, 128) partials -> finish the mean in JAX.
    return jnp.sum(partial_sums) / (B * n_pix)


def focal_loss_ref(inp, target, k_weight, gamma=2):
    # Pure-JAX reference mirroring the PyTorch forward.
    pt = jnp.take_along_axis(inp, target[:, None], axis=1)       # (B,1,H,W)
    alpha = k_weight[target][:, None]                            # (B,1,H,W)
    log_pt = jnp.log(pt) * alpha
    loss = -((1.0 - pt) ** gamma) * log_pt
    return loss.mean()


if __name__ == "__main__":
    key = jax.random.PRNGKey(0)
    B, C, H, W = 2, 4, 16, 16
    gamma = 2

    k_logits, k_tgt = jax.random.split(key)
    logits = jax.random.normal(k_logits, (B, C, H, W), dtype=jnp.float32)
    inp = jax.nn.softmax(logits, axis=1)                         # probabilities, NCHW
    target = jax.random.randint(k_tgt, (B, H, W), 0, C, dtype=jnp.int32)
    k_weight = jnp.array([0.25, 0.5, 0.75, 1.0], dtype=jnp.float32)  # deterministic init

    out = jax.block_until_ready(focal_loss(inp, target, k_weight, gamma=gamma))
    ref = focal_loss_ref(inp, target, k_weight, gamma=gamma)
    assert jnp.allclose(out, ref, rtol=1e-5, atol=1e-6), (out, ref)

    # Exercise the padded / partial-tile path (H*W not a multiple of 128).
    H2, W2 = 13, 13
    logits2 = jax.random.normal(jax.random.PRNGKey(1), (B, C, H2, W2), dtype=jnp.float32)
    inp2 = jax.nn.softmax(logits2, axis=1)
    target2 = jax.random.randint(jax.random.PRNGKey(2), (B, H2, W2), 0, C, dtype=jnp.int32)
    out2 = jax.block_until_ready(focal_loss(inp2, target2, k_weight, gamma=gamma))
    ref2 = focal_loss_ref(inp2, target2, k_weight, gamma=gamma)
    assert jnp.allclose(out2, ref2, rtol=1e-5, atol=1e-6), (out2, ref2)

    print("KERNEL_OK")
</pallas_src>

<mosaic_0001>
module attributes {stable_mosaic.version = 11 : i64} {
  func.func @_focal_loss_kernel(%arg0: i32, %arg1: i32, %arg2: i32, %arg3: memref<1x4x8x128xf32, #tpu.memory_space<vmem>>, %arg4: memref<1x8x128xi32, #tpu.memory_space<vmem>>, %arg5: memref<4xf32, #tpu.memory_space<smem>>, %arg6: memref<1x1x8x128xf32, #tpu.memory_space<vmem>>) attributes {dimension_semantics = [#tpu.dimension_semantics<parallel>, #tpu.dimension_semantics<parallel>, #tpu.dimension_semantics<arbitrary>], iteration_bounds = array<i64: 2, 1, 1>, scalar_prefetch = 0 : i64, scratch_operands = 0 : i64, tpu.core_type = #tpu.core_type<tc>, window_params = [{transform_indices = @transform_0, window_bounds = array<i64: 1, 4, 8, 128>}, {transform_indices = @transform_1, window_bounds = array<i64: 1, 8, 128>}, {transform_indices = @transform_2, window_bounds = array<i64: 4>}, {transform_indices = @transform_3, window_bounds = array<i64: 1, 1, 8, 128>}]} {
    %c0_i32 = arith.constant 0 : i32
    %0 = arith.cmpi eq, %arg2, %c0_i32 : i32
    %1 = arith.extui %0 : i1 to i32
    %c0_i32_0 = arith.constant 0 : i32
    %2 = arith.cmpi ne, %1, %c0_i32_0 : i32
    scf.if %2 {
      %cst_34 = arith.constant 0.000000e+00 : f32
      %67 = vector.broadcast %cst_34 : f32 to vector<8x128xf32>
      %c0_35 = arith.constant 0 : index
      %c0_36 = arith.constant 0 : index
      %c0_37 = arith.constant 0 : index
      %c0_38 = arith.constant 0 : index
      %68 = vector.load %arg6[%c0_35, %c0_36, %c0_37, %c0_38] : memref<1x1x8x128xf32, #tpu.memory_space<vmem>>, vector<1x1x8x128xf32>
      %69 = vector.shape_cast %68 : vector<1x1x8x128xf32> to vector<8x128xf32>
      %70 = vector.shape_cast %67 : vector<8x128xf32> to vector<1x1x8x128xf32>
      tpu.vector_store %arg6[%c0_35, %c0_36, %c0_37, %c0_38], %70 {strides = array<i32>} : memref<1x1x8x128xf32, #tpu.memory_space<vmem>>, vector<1x1x8x128xf32>,
    } else {
    }
    %c0 = arith.constant 0 : index
    %c0_1 = arith.constant 0 : index
    %c0_2 = arith.constant 0 : index
    %3 = vector.load %arg4[%c0, %c0_1, %c0_2] : memref<1x8x128xi32, #tpu.memory_space<vmem>>, vector<1x8x128xi32>
    %4 = vector.shape_cast %3 : vector<1x8x128xi32> to vector<8x128xi32>
    %cst = arith.constant 0.000000e+00 : f32
    %5 = vector.broadcast %cst : f32 to vector<8x128xf32>
    %cst_3 = arith.constant 0.000000e+00 : f32
    %6 = vector.broadcast %cst_3 : f32 to vector<8x128xf32>
    %c0_i32_4 = arith.constant 0 : i32
    %7 = vector.broadcast %c0_i32_4 : i32 to vector<8x128xi32>
    %8 = arith.cmpi eq, %4, %7 : vector<8x128xi32>
    %c0_5 = arith.constant 0 : index
    %c0_6 = arith.constant 0 : index
    %c0_7 = arith.constant 0 : index
    %c0_8 = arith.constant 0 : index
    %9 = vector.load %arg3[%c0_5, %c0_6, %c0_7, %c0_8] : memref<1x4x8x128xf32, #tpu.memory_space<vmem>>, vector<1x1x8x128xf32>
    %10 = vector.shape_cast %9 : vector<1x1x8x128xf32> to vector<8x128xf32>
    %11 = arith.select %8, %10, %5 : vector<8x128xi1>, vector<8x128xf32>
    %c0_9 = arith.constant 0 : index
    %12 = memref.load %arg5[%c0_9] : memref<4xf32, #tpu.memory_space<smem>>
    %13 = vector.broadcast %12 : f32 to vector<8x128xf32>
    %14 = arith.select %8, %13, %6 : vector<8x128xi1>, vector<8x128xf32>
    %c1_i32 = arith.constant 1 : i32
    %15 = vector.broadcast %c1_i32 : i32 to vector<8x128xi32>
    %16 = arith.cmpi eq, %4, %15 : vector<8x128xi32>
    %c0_10 = arith.constant 0 : index
    %c1 = arith.constant 1 : index
    %c0_11 = arith.constant 0 : index
    %c0_12 = arith.constant 0 : index
    %17 = vector.load %arg3[%c0_10, %c1, %c0_11, %c0_12] : memref<1x4x8x128xf32, #tpu.memory_space<vmem>>, vector<1x1x8x128xf32>
    %18 = vector.shape_cast %17 : vector<1x1x8x128xf32> to vector<8x128xf32>
    %19 = arith.select %16, %18, %11 : vector<8x128xi1>, vector<8x128xf32>
    %c1_13 = arith.constant 1 : index
    %20 = memref.load %arg5[%c1_13] : memref<4xf32, #tpu.memory_space<smem>>
    %21 = vector.broadcast %20 : f32 to vector<8x128xf32>
    %22 = arith.select %16, %21, %14 : vector<8x128xi1>, vector<8x128xf32>
    %c2_i32 = arith.constant 2 : i32
    %23 = vector.broadcast %c2_i32 : i32 to vector<8x128xi32>
    %24 = arith.cmpi eq, %4, %23 : vector<8x128xi32>
    %c0_14 = arith.constant 0 : index
    %c2 = arith.constant 2 : index
    %c0_15 = arith.constant 0 : index
    %c0_16 = arith.constant 0 : index
    %25 = vector.load %arg3[%c0_14, %c2, %c0_15, %c0_16] : memref<1x4x8x128xf32, #tpu.memory_space<vmem>>, vector<1x1x8x128xf32>
    %26 = vector.shape_cast %25 : vector<1x1x8x128xf32> to vector<8x128xf32>
    %27 = arith.select %24, %26, %19 : vector<8x128xi1>, vector<8x128xf32>
    %c2_17 = arith.constant 2 : index
    %28 = memref.load %arg5[%c2_17] : memref<4xf32, #tpu.memory_space<smem>>
    %29 = vector.broadcast %28 : f32 to vector<8x128xf32>
    %30 = arith.select %24, %29, %22 : vector<8x128xi1>, vector<8x128xf32>
    %c3_i32 = arith.constant 3 : i32
    %31 = vector.broadcast %c3_i32 : i32 to vector<8x128xi32>
    %32 = arith.cmpi eq, %4, %31 : vector<8x128xi32>
    %c0_18 = arith.constant 0 : index
    %c3 = arith.constant 3 : index
    %c0_19 = arith.constant 0 : index
    %c0_20 = arith.constant 0 : index
    %33 = vector.load %arg3[%c0_18, %c3, %c0_19, %c0_20] : memref<1x4x8x128xf32, #tpu.memory_space<vmem>>, vector<1x1x8x128xf32>
    %34 = vector.shape_cast %33 : vector<1x1x8x128xf32> to vector<8x128xf32>
    %35 = arith.select %32, %34, %27 : vector<8x128xi1>, vector<8x128xf32>
    %c3_21 = arith.constant 3 : index
    %36 = memref.load %arg5[%c3_21] : memref<4xf32, #tpu.memory_space<smem>>
    %37 = vector.broadcast %36 : f32 to vector<8x128xf32>
    %38 = arith.select %32, %37, %30 : vector<8x128xi1>, vector<8x128xf32>
    %c1_i32_22 = arith.constant 1 : i32
    %39 = arith.muli %arg1, %c1_i32_22 : i32
    %40 = arith.addi %39, %arg2 : i32
    %41 = tpu.iota {dimensions = array<i32: 0>} : vector<8x128xi32>
    %42 = tpu.iota {dimensions = array<i32: 1>} : vector<8x128xi32>
    %c8_i32 = arith.constant 8 : i32
    %43 = arith.muli %40, %c8_i32 : i32
    %44 = vector.broadcast %43 : i32 to vector<8x128xi32>
    %45 = arith.addi %44, %41 : vector<8x128xi32>
    %c128_i32 = arith.constant 128 : i32
    %46 = vector.broadcast %c128_i32 : i32 to vector<8x128xi32>
    %47 = arith.muli %45, %46 : vector<8x128xi32>
    %48 = arith.addi %47, %42 : vector<8x128xi32>
    %c256_i32 = arith.constant 256 : i32
    %49 = vector.broadcast %c256_i32 : i32 to vector<8x128xi32>
    %50 = arith.cmpi slt, %48, %49 : vector<8x128xi32>
    %cst_23 = arith.constant 1.000000e+00 : f32
    %51 = vector.broadcast %cst_23 : f32 to vector<8x128xf32>
    %52 = arith.select %50, %35, %51 : vector<8x128xi1>, vector<8x128xf32>
    %53 = math.log %52 : vector<8x128xf32>
    %54 = arith.mulf %53, %38 : vector<8x128xf32>
    %cst_24 = arith.constant 1.000000e+00 : f32
    %55 = vector.broadcast %cst_24 : f32 to vector<8x128xf32>
    %56 = arith.subf %55, %52 : vector<8x128xf32>
    %57 = arith.mulf %56, %56 : vector<8x128xf32>
    %58 = arith.mulf %57, %54 : vector<8x128xf32>
    %cst_25 = arith.constant 0.000000e+00 : f32
    %59 = vector.broadcast %cst_25 : f32 to vector<8x128xf32>
    %60 = arith.subf %59, %58 : vector<8x128xf32>
    %c0_26 = arith.constant 0 : index
    %c0_27 = arith.constant 0 : index
    %c0_28 = arith.constant 0 : index
    %c0_29 = arith.constant 0 : index
    %61 = vector.load %arg6[%c0_26, %c0_27, %c0_28, %c0_29] : memref<1x1x8x128xf32, #tpu.memory_space<vmem>>, vector<1x1x8x128xf32>
    %62 = vector.shape_cast %61 : vector<1x1x8x128xf32> to vector<8x128xf32>
    %63 = arith.addf %62, %60 : vector<8x128xf32>
    %c0_30 = arith.constant 0 : index
    %c0_31 = arith.constant 0 : index
    %c0_32 = arith.constant 0 : index
    %c0_33 = arith.constant 0 : index
    %64 = vector.load %arg6[%c0_30, %c0_31, %c0_32, %c0_33] : memref<1x1x8x128xf32, #tpu.memory_space<vmem>>, vector<1x1x8x128xf32>
    %65 = vector.shape_cast %64 : vector<1x1x8x128xf32> to vector<8x128xf32>
    %66 = vector.shape_cast %63 : vector<8x128xf32> to vector<1x1x8x128xf32>
    tpu.vector_store %arg6[%c0_30, %c0_31, %c0_32, %c0_33], %66 {strides = array<i32>} : memref<1x1x8x128xf32, #tpu.memory_space<vmem>>, vector<1x1x8x128xf32>,
    return
  }
  func.func @transform_0(%arg0: i32, %arg1: i32, %arg2: i32) -> (i32, i32, i32, i32) {
    %c1_i32 = arith.constant 1 : i32
    %0 = arith.muli %arg1, %c1_i32 : i32
    %1 = arith.addi %0, %arg2 : i32
    %c0_i32 = arith.constant 0 : i32
    %c0_i32_0 = arith.constant 0 : i32
    %c0_i32_1 = arith.constant 0 : i32
    return %arg0, %c0_i32, %1, %c0_i32_0 : i32, i32, i32, i32
  }
  func.func @transform_1(%arg0: i32, %arg1: i32, %arg2: i32) -> (i32, i32, i32) {
    %c1_i32 = arith.constant 1 : i32
    %0 = arith.muli %arg1, %c1_i32 : i32
    %1 = arith.addi %0, %arg2 : i32
    %c0_i32 = arith.constant 0 : i32
    %c0_i32_0 = arith.constant 0 : i32
    return %arg0, %1, %c0_i32 : i32, i32, i32
  }
  func.func @transform_2(%arg0: i32, %arg1: i32, %arg2: i32) -> i32 {
    %c0_i32 = arith.constant 0 : i32
    %c0_i32_0 = arith.constant 0 : i32
    return %c0_i32 : i32
  }
  func.func @transform_3(%arg0: i32, %arg1: i32, %arg2: i32) -> (i32, i32, i32, i32) {
    %c0_i32 = arith.constant 0 : i32
    %c0_i32_0 = arith.constant 0 : i32
    %c0_i32_1 = arith.constant 0 : i32
    return %arg0, %arg1, %c0_i32, %c0_i32_0 : i32, i32, i32, i32
  }
}

</mosaic_0001>

<llo_original>
// kernel: tpu_custom_call.1
$region0: #{tpu_custom_call.1}
  #allocation0 [shape = 'u32[]', space=smem, size = 0x4, offset = 0x4, fixed_abs, tag = 'smem constant byte address 0x4 - core index']
  #allocation1 [shape = 'u32[144,128]{1,0:T(1,128)}', space=vmem, size = 0x12000, scoped, tag = 'internal scratch']
  #allocation10 [shape = 's32[]', space=sflag, size = 0x4, offset = 0, fixed_abs, tag = 'sflag constant byte address 0x0 - dummy sync flag']
  %s0 = inlined_call_operand.hbm [shape: f32[2,4,2,128], index: 0, kind: input, shape index: {}]
  %s1 = inlined_call_operand.hbm [shape: s32[2,2,128], index: 1, kind: input, shape index: {}]
  %s2 = inlined_call_operand.vmem [shape: f32[4], index: 2, kind: input, shape index: {}]
  %s3 = inlined_call_operand.hbm [shape: f32[2,1,8,128], index: 3, kind: output, shape index: {}]
  %s4 = sld [smem:[#allocation0]]
  $region61: #{tpu_custom_call.1} parent=0
    _
  %s6 = ssub.s32 1, %s4
  %s7 = scalar_select 0, %s6, %s4
  $region1: #{tpu_custom_call.1} parent=0
    #allocation2 [shape = 'u8[32768]{0}', space=vmem, size = 0x8000, scoped, tag = 'input window, operand 0']
    #allocation3 [shape = 's32[2]{0}', space=sflag, size = 0x8, scoped, tag = 'scoped memory for tpu_custom_call.1']
    #allocation4 [shape = 's32[2]{0}', space=sflag, size = 0x8, scoped, tag = 'scoped memory for tpu_custom_call.1']
    #allocation5 [shape = 's32[2]{0}', space=sflag, size = 0x8, scoped, tag = 'scoped memory for tpu_custom_call.1']
    #allocation6 [shape = 'u8[8192]{0}', space=vmem, size = 0x2000, scoped, tag = 'input window, operand 1']
    #allocation7 [shape = 's32[2]{0}', space=sflag, size = 0x8, scoped, tag = 'scoped memory for tpu_custom_call.1']
    #allocation8 [shape = 'u8[512]{0}', space=smem, size = 0x200, scoped, tag = 'input window, operand 2, single buffered']
    #allocation9 [shape = 'u8[8192]{0}', space=vmem, size = 0x2000, scoped, tag = 'output window, operand 0']
    %8 = vsyncpa [#allocation3], 0
    %s9 = scalar_lea.sflag [#allocation3], 1
    %10 = vsyncpa %s9, 0
    %11 = vsyncpa [#allocation7], 0
    %s12 = scalar_lea.sflag [#allocation7], 1
    %13 = vsyncpa %s12, 0
    %14 = vsyncpa [#allocation5], 0
    %15 = vsyncpa [#allocation4], 0
    %s16 = scalar_lea.sflag [#allocation4], 1
    %17 = vsyncpa %s16, 0
    loop: start=0, step=1, limit=4
    $region2: #{tpu_custom_call.1} parent=1 // loop_pre_header
      _
    $region3: #{tpu_custom_call.1} parent=1 // loop_header
      %s19 = sphi 0, %s23
      %p20 = scmp.ge.s32.totalorder %s19, 4
      %s26 = sphi 0, %s45
      %s27 = sphi 0, %s41
      %s28 = sphi 0, %s37
      %s29 = sphi 0, %s26
      %s30 = sphi 0, %s27
      %s31 = sphi 0, %s28
      %s32 = sphi 0, %s29
      %s33 = sphi 0, %s30
      %s34 = sphi 0, %s31
      %s52 = sphi 0, %s54
      %s55 = sphi 0, %s52
      %s56 = sphi 0, %s55
      %s72 = sphi 0, %s56
      %s82 = sphi 0, %s84
      %s85 = sphi 0, %s82
      %s86 = sphi 0, %s85
      %s102 = sphi 0, %s86
      %s106 = sphi 0, %s106
      %s108 = sphi 0, %s106
      %s109 = sphi 0, %s108
      %s123 = sphi 0, %s109
      %s131 = sphi 0, %s133
      %s134 = sphi 0, %s131
      %s135 = sphi 0, %s134
      %s151 = sphi 0, %s135
    $region4: #{tpu_custom_call.1} parent=1 // loop_header_branch
      %22 = sbr.rel (%p20) target = $region8
    $region5: #{tpu_custom_call.1} parent=1 // loop_body
      %s24 = ssub.s32 %s19, 1
      %s25 = ssub.s32 %s19, 2
      %s35 = sadd.s32 1, %s28
      %p36 = scmp.ge.s32.totalorder %s35, 1
      %s37 = scalar_select %p36, 0, %s35
      %s38 = sadd.s32 1, %s27
      %s39 = scalar_select %p36, %s38, %s27
      %p40 = scmp.ge.s32.totalorder %s39, 1
      %s41 = scalar_select %p40, 0, %s39
      %s42 = sadd.s32 1, %s26
      %s43 = scalar_select %p40, %s42, %s26
      %p44 = scmp.ge.s32.totalorder %s43, 2
      %s45 = scalar_select %p44, 0, %s43
      %s46 = sadd.s32 %s27, %s28
      %s47 = sadd.s32 %s41, %s37
      %s48 = ssub.s32 %s26, %s45
      %s49 = ssub.s32 %s46, %s47
      %s50 = sor.u32 %s48, %s49
      %p51 = scmp.eq.s32.totalorder %s50, 0
      %s53 = sadd.s32 %s52, 1
      %s54 = scalar_select %p51, %s52, %s53
      %p57 = pneg %p51
      %p58 = scmp.eq.s32.totalorder %s19, 1
      %p59 = por %p57, %p58
      %p60 = scmp.ne.s32.totalorder %s52, %s55
      %p61 = scmp.eq.s32.totalorder %s19, 0
      %p62 = por %p60, %p61
      %p63 = scmp.ne.s32.totalorder %s52, %s55
      %p64 = scmp.eq.s32.totalorder %s24, 1
      %p65 = por %p63, %p64
      %p66 = scmp.ne.s32.totalorder %s55, %s56
      %p67 = scmp.eq.s32.totalorder %s24, 0
      %p68 = por %p66, %p67
      %p69 = scmp.ne.s32.totalorder %s55, %s56
      %p70 = scmp.eq.s32.totalorder %s25, 1
      %p71 = por %p69, %p70
      %p73 = scmp.ne.s32.totalorder %s56, %s72
      %p74 = scmp.eq.s32.totalorder %s25, 0
      %p75 = por %p73, %p74
      %s76 = sadd.s32 %s27, %s28
      %s77 = sadd.s32 %s41, %s37
      %s78 = ssub.s32 %s26, %s45
      %s79 = ssub.s32 %s76, %s77
      %s80 = sor.u32 %s78, %s79
      %p81 = scmp.eq.s32.totalorder %s80, 0
      %s83 = sadd.s32 %s82, 1
      %s84 = scalar_select %p81, %s82, %s83
      %p87 = pneg %p81
      %p88 = scmp.eq.s32.totalorder %s19, 1
      %p89 = por %p87, %p88
      %p90 = scmp.ne.s32.totalorder %s82, %s85
      %p91 = scmp.eq.s32.totalorder %s19, 0
      %p92 = por %p90, %p91
      %p93 = scmp.ne.s32.totalorder %s82, %s85
      %p94 = scmp.eq.s32.totalorder %s24, 1
      %p95 = por %p93, %p94
      %p96 = scmp.ne.s32.totalorder %s85, %s86
      %p97 = scmp.eq.s32.totalorder %s24, 0
      %p98 = por %p96, %p97
      %p99 = scmp.ne.s32.totalorder %s85, %s86
      %p100 = scmp.eq.s32.totalorder %s25, 1
      %p101 = por %p99, %p100
      %p103 = scmp.ne.s32.totalorder %s86, %s102
      %p104 = scmp.eq.s32.totalorder %s25, 0
      %p105 = por %p103, %p104
      %s107 = sadd.s32 %s106, 1
      %p110 = scmp.eq.s32.totalorder %s19, 1
      %p111 = scmp.ne.s32.totalorder %s106, %s108
      %p112 = scmp.eq.s32.totalorder %s19, 0
      %p113 = por %p111, %p112
      %p114 = scmp.ne.s32.totalorder %s106, %s108
      %p115 = scmp.eq.s32.totalorder %s24, 1
      %p116 = por %p114, %p115
      %p117 = scmp.ne.s32.totalorder %s108, %s109
      %p118 = scmp.eq.s32.totalorder %s24, 0
      %p119 = por %p117, %p118
      %p120 = scmp.ne.s32.totalorder %s108, %s109
      %p121 = scmp.eq.s32.totalorder %s25, 1
      %p122 = por %p120, %p121
      %p124 = scmp.ne.s32.totalorder %s109, %s123
      %p125 = scmp.eq.s32.totalorder %s25, 0
      %p126 = por %p124, %p125
      %s127 = ssub.s32 %s26, %s45
      %s128 = ssub.s32 %s27, %s41
      %s129 = sor.u32 %s127, %s128
      %p130 = scmp.eq.s32.totalorder %s129, 0
      %s132 = sadd.s32 %s131, 1
      %s133 = scalar_select %p130, %s131, %s132
      %p136 = pneg %p130
      %p137 = scmp.eq.s32.totalorder %s19, 1
      %p138 = por %p136, %p137
      %p139 = scmp.ne.s32.totalorder %s131, %s134
      %p140 = scmp.eq.s32.totalorder %s19, 0
      %p141 = por %p139, %p140
      %p142 = scmp.ne.s32.totalorder %s131, %s134
      %p143 = scmp.eq.s32.totalorder %s24, 1
      %p144 = por %p142, %p143
      %p145 = scmp.ne.s32.totalorder %s134, %s135
      %p146 = scmp.eq.s32.totalorder %s24, 0
      %p147 = por %p145, %p146
      %p148 = scmp.ne.s32.totalorder %s134, %s135
      %p149 = scmp.eq.s32.totalorder %s25, 1
      %p150 = por %p148, %p149
      %p152 = scmp.ne.s32.totalorder %s135, %s151
      %p153 = scmp.eq.s32.totalorder %s25, 0
      %p154 = por %p152, %p153
      %p155 = scmp.le.s32.totalorder 1, %s19
      %p156 = scmp.lt.s32.totalorder %s19, 3
      %p157 = pnand %p155, %p156
      %p158 = pneg %p157
      // Predicated region
      $region9: #{tpu_custom_call.1} parent=5 // pred_check
        _
      $region10: #{tpu_custom_call.1} parent=5 // pred_check_branch
        %160 = sbr.rel (%p157) target = $region12
      $region11: #{tpu_custom_call.1} parent=5 // pred_region
        %s161 = ssub.s32 %s19, 1
        // Predicated region
        $region13: #{tpu_custom_call.1} parent=11 // pred_check
          %p162 = pneg %p119
        $region14: #{tpu_custom_call.1} parent=11 // pred_check_branch
          %164 = sbr.rel (%p162) target = $region16
        $region15: #{tpu_custom_call.1} parent=11 // pred_region
          %s166 = ssub.s32 16, 16
          %167 = vsyncadd [#allocation5], %s166
          %s169 = sshll.u32 %s2, 4
          %s170 = int_to_ptr.vmem [resolvable:$true] %s169
          %172 = dma.vmem_to_smem %s170, 16, [#allocation8], [#allocation5]
        $region16: #{tpu_custom_call.1} parent=11 // pred_fallthru
          _
      $region12: #{tpu_custom_call.1} parent=5 // pred_fallthru
        _
      %p173 = scmp.lt.s32.totalorder %s19, 2
      // Predicated region
      $region17: #{tpu_custom_call.1} parent=5 // pred_check
        %p174 = pneg %p173
      $region18: #{tpu_custom_call.1} parent=5 // pred_check_branch
        %176 = sbr.rel (%p174) target = $region20
      $region19: #{tpu_custom_call.1} parent=5 // pred_region
        // Predicated region
        $region21: #{tpu_custom_call.1} parent=19 // pred_check
          %p177 = pneg %p62
        $region22: #{tpu_custom_call.1} parent=19 // pred_check_branch
          %179 = sbr.rel (%p177) target = $region24
        $region23: #{tpu_custom_call.1} parent=19 // pred_region
          #allocation11 [shape = 'u32[6]{0}', space=smem, size = 0x18, scoped, tag = 'DMA stride descriptor']
          %s180 = sand.u32 %s52, 1
          %s181 = scalar_lea.sflag [#allocation3], %s180
          %s182 = sand.u32 %s52, 1
          %s183 = smul.addr %s182, 32
          %s184 = scalar_lea.vmem [#allocation2], %s183
          %s185 = sadd.s32 %s27, %s28
          %s186 = smul.u32 4, %s185
          %s187 = ssub.s32 1, %s186
          %s188 = smul.u32 128, %s187
          %s190 = ssub.s32 512, %s188
          %191 = vsyncadd %s181, %s190
          %p192 = scmp.ne.s32.totalorder 0, %s188
          %s193 = smul.addr %s26, 4
          %s194 = sadd.s32 %s186, %s193
          %s195 = smul.addr %s194, 32
          %s196 = scalar_lea.hbm %s0, %s195
          %s197 = smul.u32 2, %s187
          %s198 = smul.u32 %s197, 4
          %s200 = sshll.u32 1, 14
          %s201 = sxor.u32 4294967295, %s200
          %s203 = sld [smem:[#allocation0]]
          %s204 = sadd.s32 2, %s203
          %s206 = sshll.u32 7, 26
          %s207 = sxor.u32 4294967295, %s206
          %s208 = sand.u32 0, %s207
          %s209 = sshll.u32 %s204, 26
          %s210 = sor.u32 %s208, %s209
          %s211 = sshll.u32 %s184, 4
          %s212 = int_to_ptr.vmem [resolvable:$true] %s211
          %s213 = sshll.u32 %s198, 4
          %218 = sst [smem:[#allocation11]] 32
          %s219 = scalar_lea.smem [#allocation11], 1
          %220 = sst [smem:[%s219]] 128
          %s221 = scalar_lea.smem [#allocation11], 2
          %222 = sst [smem:[%s221]] %s187
          %s223 = scalar_lea.smem [#allocation11], 3
          %224 = sst [smem:[%s223]] 32
          %s225 = scalar_lea.smem [#allocation11], 4
          %226 = sst [smem:[%s225]] 32
          %s227 = scalar_lea.smem [#allocation11], 5
          %228 = sst [smem:[%s227]] 2
          %230 = dma.general (%p192), %s196, %s213, %s212, %s181, [#allocation10], [#allocation11], %s210, 0
        $region24: #{tpu_custom_call.1} parent=19 // pred_fallthru
          _
        // Predicated region
        $region25: #{tpu_custom_call.1} parent=19 // pred_check
          %p231 = pneg %p92
        $region26: #{tpu_custom_call.1} parent=19 // pred_check_branch
          %233 = sbr.rel (%p231) target = $region28
        $region27: #{tpu_custom_call.1} parent=19 // pred_region
          %s234 = sand.u32 %s82, 1
          %s235 = scalar_lea.sflag [#allocation7], %s234
          %s236 = sand.u32 %s82, 1
          %s237 = smul.addr %s236, 8
          %s238 = scalar_lea.vmem [#allocation6], %s237
          %s239 = sadd.s32 %s27, %s28
          %s240 = smul.u32 4, %s239
          %s241 = ssub.s32 1, %s240
          %s242 = smul.u32 32, %s241
          %s244 = ssub.s32 128, %s242
          %245 = vsyncadd %s235, %s244
          %p246 = scmp.ne.s32.totalorder 0, %s242
          %s247 = sadd.s32 %s240, %s26
          %s248 = smul.addr %s247, 32
          %s249 = scalar_lea.hbm %s1, %s248
          %s250 = smul.u32 2, %s241
          %s251 = sshll.u32 %s238, 4
          %s252 = int_to_ptr.vmem [resolvable:$true] %s251
          %s253 = sshll.u32 %s250, 4
          %257 = dma.hbm_to_vmem [thread:$0]  (%p246), %s249, %s253, %s252, %s235, 32, 32, 2
        $region28: #{tpu_custom_call.1} parent=19 // pred_fallthru
          _
      $region20: #{tpu_custom_call.1} parent=5 // pred_fallthru
        _
      %p258 = scmp.le.s32.totalorder 1, %s19
      %p259 = scmp.lt.s32.totalorder %s19, 3
      %p260 = pnand %p258, %p259
      %p261 = pneg %p260
      // Predicated region
      $region29: #{tpu_custom_call.1} parent=5 // pred_check
        _
      $region30: #{tpu_custom_call.1} parent=5 // pred_check_branch
        %263 = sbr.rel (%p260) target = $region32
      $region31: #{tpu_custom_call.1} parent=5 // pred_region
        %s264 = ssub.s32 %s19, 1
        %s265 = sand.u32 %s55, 1
        %s266 = scalar_lea.sflag [#allocation3], %s265
        %s267 = sand.u32 %s55, 1
        %s268 = smul.addr %s267, 32
        %s269 = scalar_lea.vmem [#allocation2], %s268
        // Predicated region
        $region33: #{tpu_custom_call.1} parent=31 // pred_check
          %p270 = pneg %p68
        $region34: #{tpu_custom_call.1} parent=31 // pred_check_branch
          %272 = sbr.rel (%p270) target = $region36
        $region35: #{tpu_custom_call.1} parent=31 // pred_region
          %273 = dma.done %s266, 512
        $region36: #{tpu_custom_call.1} parent=31 // pred_fallthru
          _
        %s274 = sand.u32 %s85, 1
        %s275 = scalar_lea.sflag [#allocation7], %s274
        %s276 = sand.u32 %s85, 1
        %s277 = smul.addr %s276, 8
        %s278 = scalar_lea.vmem [#allocation6], %s277
        // Predicated region
        $region37: #{tpu_custom_call.1} parent=31 // pred_check
          %p279 = pneg %p98
        $region38: #{tpu_custom_call.1} parent=31 // pred_check_branch
          %281 = sbr.rel (%p279) target = $region40
        $region39: #{tpu_custom_call.1} parent=31 // pred_region
          %282 = dma.done %s275, 128
        $region40: #{tpu_custom_call.1} parent=31 // pred_fallthru
          _
        // Predicated region
        $region41: #{tpu_custom_call.1} parent=31 // pred_check
          %p283 = pneg %p119
        $region42: #{tpu_custom_call.1} parent=31 // pred_check_branch
          %285 = sbr.rel (%p283) target = $region44
        $region43: #{tpu_custom_call.1} parent=31 // pred_region
          %286 = dma.done [#allocation5], 16
        $region44: #{tpu_custom_call.1} parent=31 // pred_fallthru
          _
        %287 = sfence
        %s288 = sand.u32 %s55, 1
        %s289 = scalar_lea.sflag [#allocation3], %s288
        %s290 = sand.u32 %s55, 1
        %s291 = smul.addr %s290, 32
        %s292 = scalar_lea.vmem [#allocation2], %s291
        %p293 = pneg %p68
        %p294 = pneg %p65
        %s295 = sand.u32 %s85, 1
        %s296 = scalar_lea.sflag [#allocation7], %s295
        %s297 = sand.u32 %s85, 1
        %s298 = smul.addr %s297, 8
        %s299 = scalar_lea.vmem [#allocation6], %s298
        %p300 = pneg %p98
        %p301 = pneg %p95
        %p302 = pneg %p119
        %p303 = pneg %p116
        %p304 = pneg %p147
        %p305 = pneg %p144
        %s306 = sand.u32 %s134, 1
        %s307 = scalar_lea.sflag [#allocation4], %s306
        %s308 = sand.u32 %s134, 1
        %s309 = smul.addr %s308, 8
        %s310 = scalar_lea.vmem [#allocation9], %s309
        %s311 = sadd.s32 %s30, %s31
        %s312 = smul.u32 4, %s311
        %s313 = ssub.s32 1, %s312
        %s314 = smul.u32 128, %s313
        %s315 = sadd.s32 %s30, %s31
        %s316 = smul.u32 4, %s315
        %s317 = ssub.s32 1, %s316
        %s318 = smul.u32 32, %s317
        %p319 = scmp.eq.s32.totalorder %s31, 0
        // Predicated region
        $region45: #{tpu_custom_call.1} parent=31 // pred_check
          %p320 = pneg %p319
        $region46: #{tpu_custom_call.1} parent=31 // pred_check_branch
          %322 = sbr.rel (%p320) target = $region48
        $region47: #{tpu_custom_call.1} parent=31 // pred_region
          %323 = vst [vmem:[%s310] sm:$0xff] 0.0
        $region48: #{tpu_custom_call.1} parent=31 // pred_fallthru
          _
        %v324 = vld [vmem:[%s278] sm:$0xff]
        %vm325 = vcmp.eq.s32.totalorder %v324, 0
        %v326 = vld [vmem:[%s269] sm:$0xff]
        %v327 = vsel %vm325, %v326, 0.0
        %s328 = sld [smem:[#allocation8]]
        %v329 = vstv %s328
        %v330 = vsel %vm325, %v329, 0.0
        %vm331 = vcmp.eq.s32.totalorder %v324, 1
        %s332 = scalar_lea.vmem %s269, 8 [#allocation2]
        %v333 = vld [vmem:[%s332] sm:$0xff]
        %v334 = vsel %vm331, %v333, %v327
        %s335 = sld [smem:[#allocation8 + $0x1]]
        %v336 = vstv %s335
        %v337 = vsel %vm331, %v336, %v330
        %vm338 = vcmp.eq.s32.totalorder %v324, 2
        %s339 = scalar_lea.vmem %s269, 16 [#allocation2]
        %v340 = vld [vmem:[%s339] sm:$0xff]
        %v341 = vsel %vm338, %v340, %v334
        %s342 = sld [smem:[#allocation8 + $0x2]]
        %v343 = vstv %s342
        %v344 = vsel %vm338, %v343, %v337
        %vm345 = vcmp.eq.s32.totalorder %v324, 3
        %s346 = scalar_lea.vmem %s269, 24 [#allocation2]
        %v347 = vld [vmem:[%s346] sm:$0xff]
        %v348 = vsel %vm345, %v347, %v341
        %s349 = sld [smem:[#allocation8 + $0x3]]
        %v350 = vstv %s349
        %v351 = vsel %vm345, %v350, %v344
        %s352 = sadd.s32 %s30, %s31
        %v353 = vlaneseq
        %v354 = vshrl.u32 %v353, 7
        %v355 = vlaneseq
        %v356 = vand.u32 %v355, 127
        %s357 = smul.u32 %s352, 8
        %v358 = vstv %s357
        %v359 = vadd.s32 %v358, %v354
        %v360 = vmul.u32 %v359, 128
        %v361 = vadd.s32 %v360, %v356
        %vm362 = vcmp.lt.s32.totalorder %v361, 256
        %v363 = vsel %vm362, %v348, 1.0
        %v364 = vlog2.pop %v363
        %v365 = vmul.f32 %v364, 0.6931472
        %v366 = vmul.f32 %v365, %v351
        %v367 = vsub.f32 1.0, %v363
        %v368 = vmul.f32 %v367, %v367
        %v369 = vmul.f32 %v368, %v366
        %v370 = vsub.f32 0.0, %v369
        %v371 = vld [vmem:[%s310] sm:$0xff]
        %v372 = vadd.f32 %v371, %v370
        %373 = vst [vmem:[%s310] sm:$0xff] %v372
        %s374 = sand.u32 %s134, 1
        %s375 = scalar_lea.sflag [#allocation4], %s374
        %s376 = sand.u32 %s134, 1
        %s377 = smul.addr %s376, 8
        %s378 = scalar_lea.vmem [#allocation9], %s377
        // Predicated region
        $region49: #{tpu_custom_call.1} parent=31 // pred_check
          %p379 = pneg %p144
        $region50: #{tpu_custom_call.1} parent=31 // pred_check_branch
          %381 = sbr.rel (%p379) target = $region52
        $region51: #{tpu_custom_call.1} parent=31 // pred_region
          %s383 = ssub.s32 128, 128
          %384 = vsyncadd %s375, %s383
          %s385 = sadd.s32 %s30, %s29
          %s386 = smul.addr %s385, 128
          %s387 = scalar_lea.hbm %s3, %s386
          %s389 = sshll.u32 %s378, 4
          %s390 = int_to_ptr.vmem [resolvable:$true] %s389
          %392 = dma.vmem_to_hbm [thread:$0]  %s390, 128, %s387, %s375
        $region52: #{tpu_custom_call.1} parent=31 // pred_fallthru
          _
      $region32: #{tpu_custom_call.1} parent=5 // pred_fallthru
        _
      %p393 = scmp.le.s32.totalorder 2, %s19
      // Predicated region
      $region53: #{tpu_custom_call.1} parent=5 // pred_check
        %p394 = pneg %p393
      $region54: #{tpu_custom_call.1} parent=5 // pred_check_branch
        %396 = sbr.rel (%p394) target = $region56
      $region55: #{tpu_custom_call.1} parent=5 // pred_region
        %s397 = ssub.s32 %s19, 2
        // Predicated region
        $region57: #{tpu_custom_call.1} parent=55 // pred_check
          %p398 = pneg %p150
        $region58: #{tpu_custom_call.1} parent=55 // pred_check_branch
          %400 = sbr.rel (%p398) target = $region60
        $region59: #{tpu_custom_call.1} parent=55 // pred_region
          %s401 = sand.u32 %s135, 1
          %s402 = scalar_lea.sflag [#allocation4], %s401
          %s403 = sand.u32 %s135, 1
          %s404 = smul.addr %s403, 8
          %s405 = scalar_lea.vmem [#allocation9], %s404
          %406 = dma.done %s402, 128
        $region60: #{tpu_custom_call.1} parent=55 // pred_fallthru
          _
      $region56: #{tpu_custom_call.1} parent=5 // pred_fallthru
        _
    $region6: #{tpu_custom_call.1} parent=1 // loop_footer
      %s23 = sadd.s32 1, %s19
    $region7: #{tpu_custom_call.1} parent=1 // loop_footer_branch
      %18 = sbr.rel target = $region3
    $region8: #{tpu_custom_call.1} parent=1 // loop_exit
      _
    %407 = vsyncpa [#allocation3], 1
    %s408 = scalar_lea.sflag [#allocation3], 1
    %409 = vsyncpa %s408, 1
    %410 = vsyncpa [#allocation7], 1
    %s411 = scalar_lea.sflag [#allocation7], 1
    %412 = vsyncpa %s411, 1
    %413 = vsyncpa [#allocation4], 1
    %s414 = scalar_lea.sflag [#allocation4], 1
    %415 = vsyncpa %s414, 1
    %416 = vsyncpa [#allocation5], 1
    %s417 = scalar_lea.sflag [#allocation5], 1
    %418 = vsyncpa %s417, 1

</llo_original>
